<compile_context>
chip_gen: v6e
topology: v6e:2x2x1
jax: 0.10.0
libtpu: 0.0.40
codegen_flags: <defaults>
</compile_context>

<pallas_src>
import functools

import jax
import jax.numpy as jnp
from jax import lax
from jax.experimental import pallas as pl
from jax.experimental.pallas import tpu as pltpu


def _sse_kernel(pred_ref, gt_ref, out_ref, acc_ref, *,
                blk_r, g_per, n_rows, scale, needs_mask, low_prec_diff):
    """Accumulates sum of squared error for one row-partition of the (R, C) view."""
    p = pl.program_id(0)   # partition axis (per-TensorCore share on megacore parts)
    g = pl.program_id(1)   # reduction axis ("arbitrary": accumulator stays resident)

    @pl.when(g == 0)
    def _init():
        acc_ref[...] = jnp.zeros_like(acc_ref)

    row_start = (p * g_per + g) * blk_r   # logical (unclamped) first row of this step

    def _accumulate(masked):
        if low_prec_diff and pred_ref.dtype == jnp.bfloat16:
            # bf16 VPU (v6e/v7x): subtract in bf16, widen only for the square-accumulate.
            d = (pred_ref[...] - gt_ref[...]).astype(jnp.float32)
        else:
            d = pred_ref[...].astype(jnp.float32) - gt_ref[...].astype(jnp.float32)
        if masked:
            # Zero rows past the end of the array (padding may be garbage/NaN);
            # masking happens before the square so the result is NaN-safe.
            row_ids = row_start + lax.broadcasted_iota(jnp.int32, (blk_r, 1), 0)
            d = jnp.where(row_ids < n_rows, d, 0.0)
        dd = d * d
        # Fold the blk_r rows into the small 8-sublane accumulator using plain
        # vreg adds (no cross-lane/XLU work in the steady state).
        groups = blk_r // 8
        if groups > 0:
            acc_ref[...] += dd[: groups * 8, :].reshape(groups, 8, dd.shape[-1]).sum(axis=0)
        rem = blk_r - groups * 8
        if rem:   # only possible for tiny inputs where blk_r == R and R % 8 != 0
            acc_ref[0:rem, :] = acc_ref[0:rem, :] + dd[groups * 8:, :]

    if not needs_mask:
        # Statically known: every block is full and unique -> mask-free fast path.
        _accumulate(False)
    else:
        block_end = row_start + blk_r

        @pl.when(block_end <= n_rows)
        def _interior():
            _accumulate(False)

        @pl.when(jnp.logical_and(row_start < n_rows, block_end > n_rows))
        def _ragged():
            _accumulate(True)
        # row_start >= n_rows: clamped duplicate block -> skip all compute.

    @pl.when(g == pl.num_programs(1) - 1)
    def _finalize():
        # Single cross-lane/sublane reduce per partition; fold the 0.5/(B*N) scale here.
        s = jnp.sum(acc_ref[...]) * scale
        out_ref[...] = jnp.full(out_ref.shape, s, dtype=jnp.float32)


def _device_kind():
    try:
        return jax.devices()[0].device_kind.lower()
    except Exception:
        return ""


def temporal_affinity_loss(output, taf_target, *,
                           target_tile_bytes=None,
                           num_partitions=None):
    """Pallas implementation of TemporalAffinityLoss.forward.

    output, taf_target: (B, num_joints, H, W) float arrays (NCHW, as in PyTorch).
    """
    assert output.shape == taf_target.shape, "pred/target shapes must match"
    B = output.shape[0]
    N = output.size // B                 # per-frame flattened size: num_joints*H*W
    R = B * output.shape[1]              # rows = frames * joints  (sublane axis)
    C = output.size // R                 # cols = H * W            (lane axis, contiguous)

    kind = _device_kind()
    is_v7x = "v7" in kind
    is_v5 = "v5" in kind

    if num_partitions is None:
        num_partitions = 2 if is_v7x else 1            # v5e/v6e: single TensorCore
    if target_tile_bytes is None:
        # v7x has only 64 MiB VMEM/TC -> keep tiles <= 2 MiB; v5e/v6e can take 4 MiB.
        target_tile_bytes = (2 if is_v7x else 4) * 1024 * 1024
    vmem_limit = (32 if is_v7x else 64) * 1024 * 1024

    # Free, layout-preserving reshapes (no transpose, no extra HBM pass).
    pred = output.reshape(R, C)
    gt = taf_target.reshape(R, C)

    itemsize = jnp.dtype(output.dtype).itemsize
    rows_fit = max(1, int(target_tile_bytes) // (C * itemsize))
    if rows_fit >= R:
        blk_r = R                                       # whole array in one block (full-dim ok)
    else:
        blk_r = min(R, max(16, (rows_fit // 16) * 16))  # multiple of 16: safe for f32 & bf16

    n_row_blocks = -(-R // blk_r)
    P = max(1, int(num_partitions))
    P = min(P, n_row_blocks)

    # When splitting across TensorCores, prefer a blk_r whose block count divides
    # evenly by P so no core issues a clamped duplicate-tile DMA (keeps the split balanced).
    if P > 1 and blk_r < R and n_row_blocks % P != 0:
        cand = blk_r - 16
        while cand >= 16:
            if (-(-R // cand)) % P == 0:
                blk_r = cand
                n_row_blocks = -(-R // blk_r)
                break
            cand -= 16

    g_per = -(-n_row_blocks // P)
    needs_mask = (R % blk_r != 0) or (g_per * P != n_row_blocks)
    scale = 0.5 / float(B * N)           # 0.5 * per-frame mean, summed, / batch

    def row_block_index(p, g):
        # Clamp so the DMA never starts past the array; duplicate blocks skip compute.
        return (jnp.minimum(p * g_per + g, n_row_blocks - 1), 0)

    kernel = functools.partial(
        _sse_kernel, blk_r=blk_r, g_per=g_per, n_rows=R, scale=scale,
        needs_mask=needs_mask, low_prec_diff=not is_v5)

    partials = pl.pallas_call(
        kernel,
        out_shape=jax.ShapeDtypeStruct((P, 8, 128), jnp.float32),
        grid_spec=pltpu.PrefetchScalarGridSpec(
            num_scalar_prefetch=0,
            grid=(P, g_per),
            in_specs=[
                pl.BlockSpec((blk_r, C), row_block_index),
                pl.BlockSpec((blk_r, C), row_block_index),
            ],
            # One lane-dense (8,128) output block per partition -> no cross-core conflicts.
            out_specs=pl.BlockSpec((1, 8, 128), lambda p, g: (p, 0, 0)),
            scratch_shapes=[pltpu.VMEM((8, C), jnp.float32)],
        ),
        compiler_params=pltpu.CompilerParams(
            # NOTE: on v7x, if a profile shows both partitions landing on one
            # TensorCore, switch the first axis to pltpu.CORE_PARALLEL (or move
            # to pl.core_map over pltpu.create_tensorcore_mesh) to force the split.
            dimension_semantics=("parallel", "arbitrary"),
            vmem_limit_bytes=vmem_limit,
        ),
    )(pred, gt)

    # Each partition's scalar partial is replicated across its (8,128) block.
    return jnp.sum(partials[:, 0, 0])


def _reference_loss(output, taf_target):
    """Pure-JAX reference mirroring the PyTorch per-frame loop."""
    B = output.shape[0]
    loss = 0.0
    for f in range(B):
        loss = loss + 0.5 * jnp.mean((output[f] - taf_target[f]) ** 2)
    return loss / B


if __name__ == "__main__":
    key = jax.random.PRNGKey(0)

    # Primary small test consistent with the module's forward: (B, num_joints, H, W)
    k1, k2, k3, k4, k5, k6 = jax.random.split(key, 6)
    B, J, H, W = 2, 4, 16, 16
    output = jax.random.normal(k1, (B, J, H, W), dtype=jnp.float32)
    taf_target = jax.random.normal(k2, (B, J, H, W), dtype=jnp.float32)

    loss = jax.block_until_ready(temporal_affinity_loss(output, taf_target))
    ref = _reference_loss(output, taf_target)
    assert jnp.allclose(loss, ref, rtol=1e-5, atol=1e-6), (loss, ref)

    # Robustness: lane dim not a multiple of 128 and R not a multiple of 8
    # (exercises the full-block + sublane-remainder accumulate path).
    o2 = jax.random.normal(k3, (2, 3, 17, 16), dtype=jnp.float32)
    t2 = jax.random.normal(k4, (2, 3, 17, 16), dtype=jnp.float32)
    l2 = jax.block_until_ready(temporal_affinity_loss(o2, t2))
    assert jnp.allclose(l2, _reference_loss(o2, t2), rtol=1e-5, atol=1e-6)

    # Robustness: forced small tile so the ragged boundary block (and, on
    # megacore parts, the clamped duplicate-block skip) paths are exercised.
    o3 = jax.random.normal(k5, (4, 10, 16, 16), dtype=jnp.float32)
    t3 = jax.random.normal(k6, (4, 10, 16, 16), dtype=jnp.float32)
    l3 = jax.block_until_ready(
        temporal_affinity_loss(o3, t3, target_tile_bytes=16 * 1024))  # blk_r=16, R=40
    assert jnp.allclose(l3, _reference_loss(o3, t3), rtol=1e-5, atol=1e-6)

    print("KERNEL_OK")
</pallas_src>

<mosaic_0001>
module attributes {stable_mosaic.version = 11 : i64} {
  func.func @_sse_kernel(%arg0: i32, %arg1: i32, %arg2: memref<8x256xf32, #tpu.memory_space<vmem>>, %arg3: memref<8x256xf32, #tpu.memory_space<vmem>>, %arg4: memref<1x8x128xf32, #tpu.memory_space<vmem>>, %arg5: memref<8x256xf32, #tpu.memory_space<vmem>>) attributes {dimension_semantics = [#tpu.dimension_semantics<parallel>, #tpu.dimension_semantics<arbitrary>], iteration_bounds = array<i64: 1, 1>, scalar_prefetch = 0 : i64, scratch_operands = 1 : i64, tpu.core_type = #tpu.core_type<tc>, window_params = [{transform_indices = @transform_0, window_bounds = array<i64: 8, 256>}, {transform_indices = @transform_1, window_bounds = array<i64: 8, 256>}, {transform_indices = @transform_2, window_bounds = array<i64: 1, 8, 128>}]} {
    %c0_i32 = arith.constant 0 : i32
    %0 = arith.cmpi eq, %arg1, %c0_i32 : i32
    %1 = arith.extui %0 : i1 to i32
    %c0_i32_0 = arith.constant 0 : i32
    %2 = arith.cmpi ne, %1, %c0_i32_0 : i32
    scf.if %2 {
      %cst_10 = arith.constant 0.000000e+00 : f32
      %15 = vector.broadcast %cst_10 : f32 to vector<8x256xf32>
      %c0_11 = arith.constant 0 : index
      %c0_12 = arith.constant 0 : index
      %16 = vector.load %arg5[%c0_11, %c0_12] : memref<8x256xf32, #tpu.memory_space<vmem>>, vector<8x256xf32>
      tpu.vector_store %arg5[%c0_11, %c0_12], %15 {strides = array<i32>} : memref<8x256xf32, #tpu.memory_space<vmem>>, vector<8x256xf32>,
    } else {
    }
    %c0 = arith.constant 0 : index
    %c0_1 = arith.constant 0 : index
    %3 = vector.load %arg2[%c0, %c0_1] : memref<8x256xf32, #tpu.memory_space<vmem>>, vector<8x256xf32>
    %c0_2 = arith.constant 0 : index
    %c0_3 = arith.constant 0 : index
    %4 = vector.load %arg3[%c0_2, %c0_3] : memref<8x256xf32, #tpu.memory_space<vmem>>, vector<8x256xf32>
    %5 = arith.subf %3, %4 : vector<8x256xf32>
    %6 = arith.mulf %5, %5 : vector<8x256xf32>
    %c0_4 = arith.constant 0 : index
    %c0_5 = arith.constant 0 : index
    %7 = vector.load %arg5[%c0_4, %c0_5] : memref<8x256xf32, #tpu.memory_space<vmem>>, vector<8x256xf32>
    %8 = vector.shape_cast %6 : vector<8x256xf32> to vector<1x8x256xf32>
    %cst = arith.constant dense<0.000000e+00> : vector<8x256xf32>
    %9 = vector.multi_reduction <add>, %8, %cst [0] : vector<1x8x256xf32> to vector<8x256xf32>
    %10 = arith.addf %7, %9 : vector<8x256xf32>
    %c0_6 = arith.constant 0 : index
    %c0_7 = arith.constant 0 : index
    %11 = vector.load %arg5[%c0_6, %c0_7] : memref<8x256xf32, #tpu.memory_space<vmem>>, vector<8x256xf32>
    tpu.vector_store %arg5[%c0_6, %c0_7], %10 {strides = array<i32>} : memref<8x256xf32, #tpu.memory_space<vmem>>, vector<8x256xf32>,
    %c0_i32_8 = arith.constant 0 : i32
    %12 = arith.cmpi eq, %arg1, %c0_i32_8 : i32
    %13 = arith.extui %12 : i1 to i32
    %c0_i32_9 = arith.constant 0 : i32
    %14 = arith.cmpi ne, %13, %c0_i32_9 : i32
    scf.if %14 {
      %c0_10 = arith.constant 0 : index
      %c0_11 = arith.constant 0 : index
      %15 = vector.load %arg5[%c0_10, %c0_11] : memref<8x256xf32, #tpu.memory_space<vmem>>, vector<8x256xf32>
      %16 = vector.shape_cast %15 : vector<8x256xf32> to vector<1x8x256xf32>
      %cst_12 = arith.constant dense<0.000000e+00> : vector<1xf32>
      %17 = vector.multi_reduction <add>, %16, %cst_12 [1, 2] : vector<1x8x256xf32> to vector<1xf32>
      %18 = vector.shape_cast %17 : vector<1xf32> to vector<1x1x1xf32>
      %19 = vector.extract %18[0, 0, 0] : f32 from vector<1x1x1xf32>
      %cst_13 = arith.constant 2.44140625E-4 : f32
      %20 = arith.mulf %19, %cst_13 : f32
      %21 = vector.broadcast %20 : f32 to vector<1x8x128xf32>
      %c0_14 = arith.constant 0 : index
      %c0_15 = arith.constant 0 : index
      %c0_16 = arith.constant 0 : index
      %22 = vector.load %arg4[%c0_14, %c0_15, %c0_16] : memref<1x8x128xf32, #tpu.memory_space<vmem>>, vector<1x8x128xf32>
      tpu.vector_store %arg4[%c0_14, %c0_15, %c0_16], %21 {strides = array<i32>} : memref<1x8x128xf32, #tpu.memory_space<vmem>>, vector<1x8x128xf32>,
    } else {
    }
    return
  }
  func.func @transform_0(%arg0: i32, %arg1: i32) -> (i32, i32) {
    %c1_i32 = arith.constant 1 : i32
    %0 = arith.muli %arg0, %c1_i32 : i32
    %1 = arith.addi %0, %arg1 : i32
    %c0_i32 = arith.constant 0 : i32
    %2 = arith.minsi %1, %c0_i32 : i32
    %c0_i32_0 = arith.constant 0 : i32
    %c0_i32_1 = arith.constant 0 : i32
    return %2, %c0_i32_0 : i32, i32
  }
  func.func @transform_1(%arg0: i32, %arg1: i32) -> (i32, i32) {
    %c1_i32 = arith.constant 1 : i32
    %0 = arith.muli %arg0, %c1_i32 : i32
    %1 = arith.addi %0, %arg1 : i32
    %c0_i32 = arith.constant 0 : i32
    %2 = arith.minsi %1, %c0_i32 : i32
    %c0_i32_0 = arith.constant 0 : i32
    %c0_i32_1 = arith.constant 0 : i32
    return %2, %c0_i32_0 : i32, i32
  }
  func.func @transform_2(%arg0: i32, %arg1: i32) -> (i32, i32, i32) {
    %c0_i32 = arith.constant 0 : i32
    %c0_i32_0 = arith.constant 0 : i32
    %c0_i32_1 = arith.constant 0 : i32
    return %arg0, %c0_i32, %c0_i32_0 : i32, i32, i32
  }
}

</mosaic_0001>

<llo_original>
// kernel: tpu_custom_call.1
$region0: #{tpu_custom_call.1}
  #allocation0 [shape = 'u32[]', space=smem, size = 0x4, offset = 0x4, fixed_abs, tag = 'smem constant byte address 0x4 - core index']
  #allocation1 [shape = 'u32[144,128]{1,0:T(1,128)}', space=vmem, size = 0x12000, scoped, tag = 'internal scratch']
  #allocation2 [shape = 'f32[8,256]{1,0:T(8,128)}', space=vmem, size = 0x2000, scoped, tag = 'scratch operand']
  %s0 = inlined_call_operand.hbm [shape: f32[8,256], index: 0, kind: input, shape index: {}]
  %s1 = inlined_call_operand.hbm [shape: f32[8,256], index: 1, kind: input, shape index: {}]
  %s2 = inlined_call_operand.hbm [shape: f32[1,8,128], index: 2, kind: output, shape index: {}]
  %s3 = sld [smem:[#allocation0]]
  $region34: #{tpu_custom_call.1} parent=0
    _
  %s5 = ssub.s32 1, %s3
  %s6 = scalar_select 0, %s5, %s3
  $region1: #{tpu_custom_call.1} parent=0
    #allocation3 [shape = 'u8[8192]{0}', space=vmem, size = 0x2000, scoped, tag = 'input window, operand 0, single buffered']
    #allocation4 [shape = 's32[1]{0}', space=sflag, size = 0x4, scoped, tag = 'scoped memory for tpu_custom_call.1']
    #allocation5 [shape = 's32[1]{0}', space=sflag, size = 0x4, scoped, tag = 'scoped memory for tpu_custom_call.1']
    #allocation6 [shape = 'u8[8192]{0}', space=vmem, size = 0x2000, scoped, tag = 'input window, operand 1, single buffered']
    #allocation7 [shape = 's32[1]{0}', space=sflag, size = 0x4, scoped, tag = 'scoped memory for tpu_custom_call.1']
    #allocation8 [shape = 'u8[4096]{0}', space=vmem, size = 0x1000, scoped, tag = 'output window, operand 0, single buffered']
    %7 = vsyncpa [#allocation4], 0
    %8 = vsyncpa [#allocation7], 0
    %9 = vsyncpa [#allocation5], 0
    // Predicated region
    $region2: #{tpu_custom_call.1} parent=1 // pred_check
      _
    $region3: #{tpu_custom_call.1} parent=1 // pred_check_branch
      %11 = sbr.rel (0) target = $region5
    $region4: #{tpu_custom_call.1} parent=1 // pred_region
      %s12 = sadd.s32 0, 0
      %p13 = scmp.lt.s32.totalorder %s12, 0
      %s14 = scalar_select %p13, %s12, 0
      %s16 = ssub.s32 256, 256
      %17 = vsyncadd [#allocation4], %s16
      %s18 = smul.addr %s14, 2
      %s19 = smul.addr %s18, 128
      %s20 = scalar_lea.hbm %s0, %s19
      %s22 = sshll.u32 [#allocation3], 4
      %s23 = int_to_ptr.vmem [resolvable:$true] %s22
      %25 = dma.hbm_to_vmem [thread:$0]  %s20, 256, %s23, [#allocation4]
    $region5: #{tpu_custom_call.1} parent=1 // pred_fallthru
      _
    // Predicated region
    $region6: #{tpu_custom_call.1} parent=1 // pred_check
      _
    $region7: #{tpu_custom_call.1} parent=1 // pred_check_branch
      %27 = sbr.rel (0) target = $region9
    $region8: #{tpu_custom_call.1} parent=1 // pred_region
      %s28 = sadd.s32 0, 0
      %p29 = scmp.lt.s32.totalorder %s28, 0
      %s30 = scalar_select %p29, %s28, 0
      %s32 = ssub.s32 256, 256
      %33 = vsyncadd [#allocation7], %s32
      %s34 = smul.addr %s30, 2
      %s35 = smul.addr %s34, 128
      %s36 = scalar_lea.hbm %s1, %s35
      %s38 = sshll.u32 [#allocation6], 4
      %s39 = int_to_ptr.vmem [resolvable:$true] %s38
      %41 = dma.hbm_to_vmem [thread:$0]  %s36, 256, %s39, [#allocation7]
    $region9: #{tpu_custom_call.1} parent=1 // pred_fallthru
      _
    // Predicated region
    $region10: #{tpu_custom_call.1} parent=1 // pred_check
      _
    $region11: #{tpu_custom_call.1} parent=1 // pred_check_branch
      %43 = sbr.rel (0) target = $region13
    $region12: #{tpu_custom_call.1} parent=1 // pred_region
      %44 = dma.done [#allocation4], 256
    $region13: #{tpu_custom_call.1} parent=1 // pred_fallthru
      _
    // Predicated region
    $region14: #{tpu_custom_call.1} parent=1 // pred_check
      _
    $region15: #{tpu_custom_call.1} parent=1 // pred_check_branch
      %46 = sbr.rel (0) target = $region17
    $region16: #{tpu_custom_call.1} parent=1 // pred_region
      %47 = dma.done [#allocation7], 256
    $region17: #{tpu_custom_call.1} parent=1 // pred_fallthru
      _
    %s48 = sadd.s32 0, 0
    %p49 = scmp.lt.s32.totalorder %s48, 0
    %s50 = scalar_select %p49, %s48, 0
    %s51 = sadd.s32 0, 0
    %p52 = scmp.lt.s32.totalorder %s51, 0
    %s53 = scalar_select %p52, %s51, 0
    %p54 = scmp.eq.s32.totalorder 0, 0
    // Predicated region
    $region18: #{tpu_custom_call.1} parent=1 // pred_check
      %p55 = pneg %p54
    $region19: #{tpu_custom_call.1} parent=1 // pred_check_branch
      %57 = sbr.rel (%p55) target = $region21
    $region20: #{tpu_custom_call.1} parent=1 // pred_region
      %58 = vst [vmem:[#allocation2] sm:$0xff] 0.0
      %59 = vst [vmem:[#allocation2 + $0x8] sm:$0xff] 0.0
    $region21: #{tpu_custom_call.1} parent=1 // pred_fallthru
      _
    %v60 = vld [vmem:[#allocation3] sm:$0xff]
    %v61 = vld [vmem:[#allocation3 + $0x8] sm:$0xff]
    %v62 = vld [vmem:[#allocation6] sm:$0xff]
    %v63 = vld [vmem:[#allocation6 + $0x8] sm:$0xff]
    %v64 = vsub.f32 %v60, %v62
    %v65 = vsub.f32 %v61, %v63
    %v66 = vmul.f32 %v64, %v64
    %v67 = vmul.f32 %v65, %v65
    %v68 = vld [vmem:[#allocation2] sm:$0xff]
    %v69 = vld [vmem:[#allocation2 + $0x8] sm:$0xff]
    %v70 = vadd.f32 %v66, 0.0
    %v71 = vadd.f32 %v67, 0.0
    %v72 = vadd.f32 %v68, %v70
    %v73 = vadd.f32 %v69, %v71
    %74 = vst [vmem:[#allocation2] sm:$0xff] %v72
    %75 = vst [vmem:[#allocation2 + $0x8] sm:$0xff] %v73
    // Predicated region
    $region22: #{tpu_custom_call.1} parent=1 // pred_check
      %p76 = pneg %p54
    $region23: #{tpu_custom_call.1} parent=1 // pred_check_branch
      %78 = sbr.rel (%p76) target = $region25
    $region24: #{tpu_custom_call.1} parent=1 // pred_region
      %v79 = vld [vmem:[#allocation2] sm:$0xff]
      %v80 = vld [vmem:[#allocation2 + $0x8] sm:$0xff]
      %v81 = vadd.f32 %v79, %v80
      %82 = vadd.xlane.f32.xlu0 %v81
      %v83 = vpop.xlane.xlu0 %82
      %v84 = vrot.slane %v83, 4
      %v85 = vadd.f32 %v83, %v84
      %v86 = vrot.slane %v85, 2
      %v87 = vadd.f32 %v85, %v86
      %v88 = vrot.slane %v87, 1
      %v89 = vadd.f32 %v87, %v88
      %s90 = vtos %v89
      %s91 = smul.f32 %s90, 0.00024414063
      %v92 = vstv %s91
      %93 = vst [vmem:[#allocation8] sm:$0xff] %v92
    $region25: #{tpu_custom_call.1} parent=1 // pred_fallthru
      _
    // Predicated region
    $region26: #{tpu_custom_call.1} parent=1 // pred_check
      _
    $region27: #{tpu_custom_call.1} parent=1 // pred_check_branch
      %95 = sbr.rel (0) target = $region29
    $region28: #{tpu_custom_call.1} parent=1 // pred_region
      %s97 = ssub.s32 128, 128
      %98 = vsyncadd [#allocation5], %s97
      %s100 = sshll.u32 [#allocation8], 4
      %s101 = int_to_ptr.vmem [resolvable:$true] %s100
      %103 = dma.vmem_to_hbm [thread:$0]  %s101, 128, %s2, [#allocation5]
    $region29: #{tpu_custom_call.1} parent=1 // pred_fallthru
      _
    // Predicated region
    $region30: #{tpu_custom_call.1} parent=1 // pred_check
      _
    $region31: #{tpu_custom_call.1} parent=1 // pred_check_branch
      %105 = sbr.rel (0) target = $region33
    $region32: #{tpu_custom_call.1} parent=1 // pred_region
      %106 = dma.done [#allocation5], 128
    $region33: #{tpu_custom_call.1} parent=1 // pred_fallthru
      _
    %107 = vsyncpa [#allocation4], 1
    %108 = vsyncpa [#allocation7], 1
    %109 = vsyncpa [#allocation5], 1

</llo_original>
